<compile_context>
chip_gen: v5e
topology: v5e:2x2
jax: 0.10.0
libtpu: 0.0.40
codegen_flags: <defaults>
</compile_context>

<pallas_src>
import jax
import jax.numpy as jnp
from jax.experimental import pallas as pl
from jax.experimental.pallas import tpu as pltpu

_MAX_LANE = 2048                 # search ceiling for the lane-dense last dim
_TARGET_BLOCK_BYTES = 4 << 20    # ~4 MiB per tile (good for v6e/v7x HBM roofline)
_VMEM_LIMIT_BYTES = 32 << 20     # explicit: 4 x 4 MiB buffers fit on v5e/v6e/v7x


def _capped_relu_kernel(x_ref, o_ref):
    x = x_ref[...]
    # torch.where((x > 0) & (x <= 1), x, 0)  -- NaN compares false -> 0.
    keep = jnp.logical_and(x > 0, x <= 1)
    o_ref[...] = jnp.where(keep, x, jnp.zeros((), dtype=x.dtype))


def _sublane_multiple(dtype) -> int:
    # Sub-32-bit dtypes pack along sublanes; round row tiles accordingly.
    itemsize = jnp.dtype(dtype).itemsize
    return {4: 8, 2: 16, 1: 32}.get(itemsize, 8)


def _pick_lane(total: int) -> int:
    """Largest multiple of 128 (<= _MAX_LANE) that divides `total`, else 0."""
    for cand in range(_MAX_LANE, 127, -128):
        if total % cand == 0:
            return cand
    return 0


def _capped_relu_2d(x2d: jax.Array) -> jax.Array:
    rows, lane = x2d.shape
    dtype = x2d.dtype
    itemsize = jnp.dtype(dtype).itemsize
    sublane = _sublane_multiple(dtype)

    if rows <= sublane:
        tile_rows = rows  # single block; equals the full array dim -> legal
    else:
        max_tile_rows = max(
            sublane,
            (_TARGET_BLOCK_BYTES // (lane * itemsize)) // sublane * sublane)
        # Guarantee >= 2 grid steps so the "parallel" axis can split across
        # both TensorCores on v7x (harmless on single-TC v5e/v6e).
        half = -(-rows // 2)
        half = -(-half // sublane) * sublane
        tile_rows = min(max_tile_rows, half)
        if tile_rows >= rows:
            tile_rows = rows

    grid = (pl.cdiv(rows, tile_rows),)
    total = rows * lane

    return pl.pallas_call(
        _capped_relu_kernel,
        out_shape=jax.ShapeDtypeStruct((rows, lane), dtype),
        grid=grid,
        in_specs=[pl.BlockSpec((tile_rows, lane), lambda i: (i, 0))],
        out_specs=pl.BlockSpec((tile_rows, lane), lambda i: (i, 0)),
        compiler_params=pltpu.CompilerParams(
            dimension_semantics=("parallel",),
            vmem_limit_bytes=_VMEM_LIMIT_BYTES),
        cost_estimate=pl.CostEstimate(
            flops=total, transcendentals=0,
            bytes_accessed=2 * total * itemsize),
    )(x2d)


def capped_relu(x: jax.Array) -> jax.Array:
    """Elementwise CappedReLU: x if 0 < x <= 1 else 0 (any shape / dtype)."""
    orig_shape = x.shape
    total = x.size
    if total == 0:
        return x

    lane = _pick_lane(total)
    if lane:
        # Fast path: reshape of a contiguous array is free (no pad, no slice).
        out2d = _capped_relu_2d(jnp.ravel(x).reshape(total // lane, lane))
        return out2d.reshape(orig_shape)

    # Fallback (size not a multiple of 128): minimal pad to one lane width.
    # CappedReLU(0) == 0, so zero padding is semantically inert.
    # TODO(synk): replace with an in-kernel masked tail store to drop the
    # extra HBM round trip (rare path for real NCHW activations).
    lane = 128
    padded = -(-total // lane) * lane
    xf = jnp.pad(jnp.ravel(x), (0, padded - total))
    out2d = _capped_relu_2d(xf.reshape(padded // lane, lane))
    return out2d.reshape(-1)[:total].reshape(orig_shape)


if __name__ == "__main__":
    key = jax.random.PRNGKey(0)
    # NCHW input, values in roughly [-2, 2] so all branches are exercised.
    x = jax.random.uniform(key, (2, 4, 16, 16), dtype=jnp.float32,
                           minval=-2.0, maxval=2.0)

    out = jax.block_until_ready(capped_relu(x))

    # Reference in plain JAX (same semantics as the torch module).
    ref = jnp.where(jnp.logical_and(x > 0, x <= 1), x, jnp.zeros_like(x))
    assert out.shape == x.shape and out.dtype == x.dtype
    assert jnp.array_equal(out, ref)

    print("KERNEL_OK")
</pallas_src>

<mosaic_0001>
module attributes {stable_mosaic.version = 11 : i64} {
  func.func @_capped_relu_kernel(%arg0: i32, %arg1: memref<1x2048xf32, #tpu.memory_space<vmem>>, %arg2: memref<1x2048xf32, #tpu.memory_space<vmem>>) attributes {dimension_semantics = [#tpu.dimension_semantics<parallel>], iteration_bounds = array<i64: 1>, scalar_prefetch = 0 : i64, scratch_operands = 0 : i64, tpu.core_type = #tpu.core_type<tc>, window_params = [{transform_indices = @transform_0, window_bounds = array<i64: 1, 2048>}, {transform_indices = @transform_1, window_bounds = array<i64: 1, 2048>}]} {
    %c0 = arith.constant 0 : index
    %c0_0 = arith.constant 0 : index
    %0 = vector.load %arg1[%c0, %c0_0] : memref<1x2048xf32, #tpu.memory_space<vmem>>, vector<1x2048xf32>
    %cst = arith.constant 0.000000e+00 : f32
    %1 = vector.broadcast %cst : f32 to vector<1x2048xf32>
    %2 = arith.cmpf ogt, %0, %1 : vector<1x2048xf32>
    %cst_1 = arith.constant 1.000000e+00 : f32
    %3 = vector.broadcast %cst_1 : f32 to vector<1x2048xf32>
    %4 = arith.cmpf ole, %0, %3 : vector<1x2048xf32>
    %5 = arith.andi %2, %4 : vector<1x2048xi1>
    %cst_2 = arith.constant 0.000000e+00 : f32
    %6 = vector.broadcast %cst_2 : f32 to vector<1x2048xf32>
    %7 = arith.select %5, %0, %6 : vector<1x2048xi1>, vector<1x2048xf32>
    %c0_3 = arith.constant 0 : index
    %c0_4 = arith.constant 0 : index
    %8 = vector.load %arg2[%c0_3, %c0_4] : memref<1x2048xf32, #tpu.memory_space<vmem>>, vector<1x2048xf32>
    tpu.vector_store %arg2[%c0_3, %c0_4], %7 {strides = array<i32>} : memref<1x2048xf32, #tpu.memory_space<vmem>>, vector<1x2048xf32>,
    return
  }
  func.func @transform_0(%arg0: i32) -> (i32, i32) {
    %c0_i32 = arith.constant 0 : i32
    %c0_i32_0 = arith.constant 0 : i32
    return %arg0, %c0_i32 : i32, i32
  }
  func.func @transform_1(%arg0: i32) -> (i32, i32) {
    %c0_i32 = arith.constant 0 : i32
    %c0_i32_0 = arith.constant 0 : i32
    return %arg0, %c0_i32 : i32, i32
  }
}

</mosaic_0001>

<llo_original>
// kernel: tpu_custom_call.1
$region0: #{tpu_custom_call.1}
  #allocation0 [shape = 'u32[]', space=smem, size = 0x4, offset = 0x4, fixed_abs, tag = 'smem constant byte address 0x4 - core index']
  #allocation1 [shape = 'u32[72,128]{1,0:T(1,128)}', space=vmem, size = 0x9000, scoped, tag = 'internal scratch']
  %s0 = inlined_call_operand.hbm [shape: f32[1,2048], index: 0, kind: input, shape index: {}]
  %s1 = inlined_call_operand.hbm [shape: f32[1,2048], index: 1, kind: output, shape index: {}]
  %s2 = sld [smem:[#allocation0]]
  $region18: #{tpu_custom_call.1} parent=0
    _
  %s4 = ssub.s32 1, %s2
  %s5 = scalar_select 0, %s4, %s2
  $region1: #{tpu_custom_call.1} parent=0
    #allocation2 [shape = 'u8[8192]{0}', space=vmem, size = 0x2000, scoped, tag = 'input window, operand 0, single buffered']
    #allocation3 [shape = 's32[1]{0}', space=sflag, size = 0x4, scoped, tag = 'scoped memory for tpu_custom_call.1']
    #allocation4 [shape = 's32[1]{0}', space=sflag, size = 0x4, scoped, tag = 'scoped memory for tpu_custom_call.1']
    #allocation5 [shape = 'u8[8192]{0}', space=vmem, size = 0x2000, scoped, tag = 'output window, operand 0, single buffered']
    %6 = vsyncpa [#allocation3], 0
    %7 = vsyncpa [#allocation4], 0
    // Predicated region
    $region2: #{tpu_custom_call.1} parent=1 // pred_check
      _
    $region3: #{tpu_custom_call.1} parent=1 // pred_check_branch
      %9 = sbr.rel (0) target = $region5
    $region4: #{tpu_custom_call.1} parent=1 // pred_region
      %11 = vsyncadd [#allocation3], 0
      %s13 = sshll.u32 %s0, 4
      %s14 = int_to_ptr.hbm [resolvable:$true] %s13
      %s15 = sshll.u32 [#allocation2], 4
      %s16 = int_to_ptr.vmem [resolvable:$true] %s15
      %18 = dma.hbm_to_vmem [thread:$0]  %s14, 256, %s16, [#allocation3]
    $region5: #{tpu_custom_call.1} parent=1 // pred_fallthru
      _
    // Predicated region
    $region6: #{tpu_custom_call.1} parent=1 // pred_check
      _
    $region7: #{tpu_custom_call.1} parent=1 // pred_check_branch
      %20 = sbr.rel (0) target = $region9
    $region8: #{tpu_custom_call.1} parent=1 // pred_region
      %22 = dma.done [#allocation3], 256
    $region9: #{tpu_custom_call.1} parent=1 // pred_fallthru
      _
    %v23 = vld [vmem:[#allocation2] sm:$0xff]
    %v24 = vld [vmem:[#allocation2 + $0x8] sm:$0xff]
    %vm25 = vcmp.gt.f32.partialorder %v23, 0.0
    %vm26 = vcmp.gt.f32.partialorder %v24, 0.0
    %vm27 = vcmp.le.f32.partialorder %v23, 1.0
    %vm28 = vcmp.le.f32.partialorder %v24, 1.0
    %vm29 = vmand %vm25, %vm27
    %vm30 = vmand %vm26, %vm28
    %v31 = vsel %vm29, %v23, 0.0
    %v32 = vsel %vm30, %v24, 0.0
    %33 = vst [vmem:[#allocation5] sm:$0xff] %v31
    %34 = vst [vmem:[#allocation5 + $0x8] sm:$0xff] %v32
    // Predicated region
    $region10: #{tpu_custom_call.1} parent=1 // pred_check
      _
    $region11: #{tpu_custom_call.1} parent=1 // pred_check_branch
      %36 = sbr.rel (0) target = $region13
    $region12: #{tpu_custom_call.1} parent=1 // pred_region
      %38 = vsyncadd [#allocation4], 0
      %s40 = sshll.u32 [#allocation5], 4
      %s41 = int_to_ptr.vmem [resolvable:$true] %s40
      %s42 = sshll.u32 %s1, 4
      %s43 = int_to_ptr.hbm [resolvable:$true] %s42
      %45 = dma.vmem_to_hbm [thread:$0]  %s41, 256, %s43, [#allocation4]
    $region13: #{tpu_custom_call.1} parent=1 // pred_fallthru
      _
    // Predicated region
    $region14: #{tpu_custom_call.1} parent=1 // pred_check
      _
    $region15: #{tpu_custom_call.1} parent=1 // pred_check_branch
      %47 = sbr.rel (0) target = $region17
    $region16: #{tpu_custom_call.1} parent=1 // pred_region
      %49 = dma.done [#allocation4], 256
    $region17: #{tpu_custom_call.1} parent=1 // pred_fallthru
      _
    %50 = vsyncpa [#allocation3], 1
    %51 = vsyncpa [#allocation4], 1

</llo_original>
